<compile_context>
chip_gen: v6e
topology: v6e:2x2x1
jax: 0.10.0
libtpu: 0.0.40
codegen_flags: <defaults>
</compile_context>

<pallas_src>
import functools

import jax
import jax.numpy as jnp
from jax.experimental import pallas as pl
from jax.experimental.pallas import tpu as pltpu


BN_EPS = 1e-3      # nn.BatchNorm1d(eps=0.001)
VAR_EPS = 1e-4     # + 0.0001 on the exp'd variances
CLAMP_MAX = 15.0   # torch.clamp(..., max=15)


def _round_up(x, m):
    return (x + m - 1) // m * m


# -----------------------------------------------------------------------------
# Kernel
# -----------------------------------------------------------------------------
def encoder_totalvi_kernel(
    data_ref,     # [TB, IN_PAD]        bf16
    w01_ref,      # [IN_PAD, 2*H_PAD]   bf16  scale-folded [enc0 | l_gene0]
    t01_ref,      # [1, 2*H_PAD]        f32   shift
    w1_ref,       # [H_PAD, H_PAD]      bf16  scale-folded enc layer 1
    t1_ref,       # [1, H_PAD]          f32
    wh_ref,       # [2*H_PAD, HEAD_PAD] bf16  fused heads (zm | zv,lm,lv)
    bh_ref,       # [1, HEAD_PAD]       f32
    zmask_ref,    # [1, Z_PAD]          f32   additive softmax mask (0 / -1e30)
    eps_ref,      # [TB, EPS_W]         f32   eps_z lanes [0,nz), eps_l at lane nz
    out_ref,      # [TB, OUT_W]         f32   packed outputs
    *, h_pad, z_pad, n_output, l_off, compact,
):
    f32, bf16 = jnp.float32, jnp.bfloat16

    x = data_ref[...]                                           # bf16

    # ---- encoder layer 0 and l_gene layer 0, fused over the shared LHS x ----
    hq = jnp.maximum(
        jnp.dot(x, w01_ref[...], preferred_element_type=f32) + t01_ref[...], 0.0)
    h = hq[:, :h_pad]
    qlh = hq[:, h_pad:]

    # ---- encoder layer 1 ----
    q = jnp.maximum(
        jnp.dot(h.astype(bf16), w1_ref[...], preferred_element_type=f32)
        + t1_ref[...], 0.0)

    # ---- fused heads: one lane-dense block-diagonal matmul ----
    qcat = jnp.concatenate([q, qlh], axis=-1).astype(bf16)       # [TB, 2*H_PAD]
    heads = jnp.dot(qcat, wh_ref[...], preferred_element_type=f32) + bh_ref[...]

    qz_m = heads[:, :z_pad]
    ql_m = heads[:, l_off:l_off + 1]                 # from RAW heads (no exp!)
    ql_v = jnp.exp(heads[:, l_off + 1:l_off + 2]) + VAR_EPS
    qz_v = jnp.exp(heads[:, z_pad:2 * z_pad]) + VAR_EPS

    eps_z = eps_ref[:, :z_pad]
    eps_l = eps_ref[:, n_output:n_output + 1]

    # ---- latent z: reparameterize + masked softmax (additive constant mask) --
    untran_z = qz_m + jnp.sqrt(qz_v) * eps_z
    masked = untran_z + zmask_ref[...]
    zmax = jnp.max(masked, axis=-1, keepdims=True)
    ez = jnp.exp(masked - zmax)
    z = ez * pl.reciprocal(jnp.sum(ez, axis=-1, keepdims=True), approx=True)

    # ---- library size (gene) ----
    log_lib = jnp.minimum(ql_m + jnp.sqrt(ql_v) * eps_l, CLAMP_MAX)
    lib = jnp.exp(log_lib)

    tb = x.shape[0]
    lane = jax.lax.broadcasted_iota(jnp.int32, (tb, 128), 1)

    if compact:
        # Pack all eight outputs into ONE 128-lane block (z_pad == 128 here).
        nz = n_output

        def place(block, off):
            b = block if off == 0 else pltpu.roll(block, shift=off, axis=1)
            return jnp.where((lane >= off) & (lane < off + nz), b, 0.0)

        out_ref[...] = (
            place(qz_m, 0)
            + place(qz_v, nz)
            + place(untran_z, 2 * nz)
            + place(z, 3 * nz)
            + jnp.where(lane == 4 * nz, ql_m, 0.0)
            + jnp.where(lane == 4 * nz + 1, ql_v, 0.0)
            + jnp.where(lane == 4 * nz + 2, log_lib, 0.0)
            + jnp.where(lane == 4 * nz + 3, lib, 0.0))
    else:
        # General fallback: four Z_PAD blocks + one 128-wide scalar block.
        out_ref[:, 0:z_pad] = qz_m
        out_ref[:, z_pad:2 * z_pad] = qz_v
        out_ref[:, 2 * z_pad:3 * z_pad] = untran_z
        out_ref[:, 3 * z_pad:4 * z_pad] = z
        lpack = (jnp.where(lane == 0, ql_m, 0.0)
                 + jnp.where(lane == 1, ql_v, 0.0)
                 + jnp.where(lane == 2, log_lib, 0.0)
                 + jnp.where(lane == 3, lib, 0.0))
        out_ref[:, 4 * z_pad:4 * z_pad + 128] = lpack


# -----------------------------------------------------------------------------
# Parameters (PyTorch layout; weights stored as [in, out]; BN with running stats)
# -----------------------------------------------------------------------------
def init_params(n_input, n_output, n_hidden, key):
    keys = iter(jax.random.split(key, 32))

    def lin(n_in, n_out):
        s = 1.0 / jnp.sqrt(jnp.float32(n_in))
        w = jax.random.uniform(next(keys), (n_in, n_out), jnp.float32, -s, s)
        b = jax.random.uniform(next(keys), (1, n_out), jnp.float32, -s, s)
        return {"w": w, "b": b}

    def fc(n_in, n_out):
        p = lin(n_in, n_out)
        p["gamma"] = 1.0 + 0.1 * jax.random.normal(next(keys), (1, n_out), jnp.float32)
        p["beta"] = 0.1 * jax.random.normal(next(keys), (1, n_out), jnp.float32)
        p["mean"] = 0.1 * jax.random.normal(next(keys), (1, n_out), jnp.float32)
        p["var"] = jax.random.uniform(next(keys), (1, n_out), jnp.float32, 0.5, 1.5)
        return p

    return {
        "enc0": fc(n_input, n_hidden),
        "enc1": fc(n_hidden, n_hidden),
        "lenc0": fc(n_input, n_hidden),
        "zm": lin(n_hidden, n_output),
        "zv": lin(n_hidden, n_output),
        "lm": lin(n_hidden, 1),
        "lv": lin(n_hidden, 1),
    }


# -----------------------------------------------------------------------------
# Wrapper: BN folding, weight fusion, padding, pallas_call, output split
# -----------------------------------------------------------------------------
@jax.jit
def encoder_totalvi_forward(data, params, eps_z, eps_l):
    f32, bf16 = jnp.float32, jnp.bfloat16

    B, n_input = data.shape
    n_hidden = params["enc0"]["w"].shape[1]
    n_output = params["zm"]["w"].shape[1]

    IN_PAD = _round_up(n_input, 128)
    H_PAD = _round_up(n_hidden, 128)
    Z_PAD = _round_up(n_output, 128)
    EPS_W = _round_up(n_output + 1, 128)          # eps_z lanes + 1 lane for eps_l

    pack_l = (n_output + 2) <= Z_PAD              # put lm/lv in zv's pad lanes
    L_OFF = Z_PAD + n_output if pack_l else 2 * Z_PAD
    HEAD_PAD = 2 * Z_PAD if pack_l else 2 * Z_PAD + 128
    compact = (4 * n_output + 4) <= 128           # one 128-lane output block
    OUT_W = 128 if compact else 4 * Z_PAD + 128

    def pad2(a, rows, cols):
        return jnp.pad(a, ((0, rows - a.shape[0]), (0, cols - a.shape[1])))

    def fold_bn(p):
        # eval-mode BatchNorm folded into (W * scale, shift)
        scale = p["gamma"] * jax.lax.rsqrt(p["var"] + BN_EPS)
        shift = p["beta"] + (p["b"] - p["mean"]) * scale
        return p["w"] * scale, shift

    w0f, t0 = fold_bn(params["enc0"])
    w1f, t1 = fold_bn(params["enc1"])
    lwf, tl = fold_bn(params["lenc0"])

    # fuse the two matmuls sharing LHS x: [enc layer 0 | l_gene layer 0]
    w01 = jnp.concatenate(
        [pad2(w0f, IN_PAD, H_PAD), pad2(lwf, IN_PAD, H_PAD)], axis=1).astype(bf16)
    t01 = jnp.concatenate([pad2(t0, 1, H_PAD), pad2(tl, 1, H_PAD)], axis=1)

    w1p = pad2(w1f, H_PAD, H_PAD).astype(bf16)
    t1p = pad2(t1, 1, H_PAD)

    # fused block-diagonal heads: [q | qlh] @ WH -> [zm | zv (+ lm, lv in pads)]
    wh = jnp.zeros((2 * H_PAD, HEAD_PAD), f32)
    wh = wh.at[:n_hidden, :n_output].set(params["zm"]["w"])
    wh = wh.at[:n_hidden, Z_PAD:Z_PAD + n_output].set(params["zv"]["w"])
    wh = wh.at[H_PAD:H_PAD + n_hidden, L_OFF:L_OFF + 1].set(params["lm"]["w"])
    wh = wh.at[H_PAD:H_PAD + n_hidden, L_OFF + 1:L_OFF + 2].set(params["lv"]["w"])
    wh = wh.astype(bf16)

    bh = jnp.zeros((1, HEAD_PAD), f32)
    bh = bh.at[:, :n_output].set(params["zm"]["b"])
    bh = bh.at[:, Z_PAD:Z_PAD + n_output].set(params["zv"]["b"])
    bh = bh.at[:, L_OFF:L_OFF + 1].set(params["lm"]["b"])
    bh = bh.at[:, L_OFF + 1:L_OFF + 2].set(params["lv"]["b"])

    # additive softmax mask over the padded latent lanes (constant input)
    zmask = jnp.where(jnp.arange(Z_PAD)[None, :] < n_output, 0.0, -1e30).astype(f32)

    # ---- batch tiling (data streams as bf16) ----
    TILE_B = min(256, _round_up(B, 8))
    B_pad = _round_up(B, TILE_B)
    if B_pad // TILE_B == 1 and TILE_B % 32 == 0:
        TILE_B //= 2     # keep >= 2 grid steps so both v7x TensorCores get work

    def rowpad(a):
        return jnp.pad(a, ((0, B_pad - a.shape[0]), (0, 0)))

    data_t = rowpad(pad2(data, B, IN_PAD)).astype(bf16)

    eps_blk = jnp.zeros((B, EPS_W), f32)
    eps_blk = eps_blk.at[:, :n_output].set(eps_z)
    eps_blk = eps_blk.at[:, n_output:n_output + 1].set(eps_l)
    eps_t = rowpad(eps_blk)

    row2 = lambda i: (i, 0)
    const2 = lambda i: (0, 0)
    in_specs = [
        pl.BlockSpec((TILE_B, IN_PAD), row2),
        pl.BlockSpec(w01.shape, const2),
        pl.BlockSpec(t01.shape, const2),
        pl.BlockSpec(w1p.shape, const2),
        pl.BlockSpec(t1p.shape, const2),
        pl.BlockSpec(wh.shape, const2),
        pl.BlockSpec(bh.shape, const2),
        pl.BlockSpec(zmask.shape, const2),
        pl.BlockSpec((TILE_B, EPS_W), row2),
    ]
    out_spec = pl.BlockSpec((TILE_B, OUT_W), row2)

    flops = 2 * B_pad * (IN_PAD * 2 * H_PAD + H_PAD * H_PAD + 2 * H_PAD * HEAD_PAD)
    transcendentals = B_pad * (2 * Z_PAD + 4)
    bytes_accessed = (
        data_t.size * 2 + eps_t.size * 4
        + (w01.size + w1p.size + wh.size) * 2
        + (t01.size + t1p.size + bh.size + zmask.size) * 4
        + B_pad * OUT_W * 4)

    slab = pl.pallas_call(
        functools.partial(encoder_totalvi_kernel, h_pad=H_PAD, z_pad=Z_PAD,
                          n_output=n_output, l_off=L_OFF, compact=compact),
        out_shape=jax.ShapeDtypeStruct((B_pad, OUT_W), f32),
        grid=(B_pad // TILE_B,),
        in_specs=in_specs,
        out_specs=out_spec,
        compiler_params=pltpu.CompilerParams(
            dimension_semantics=("parallel",),
            vmem_limit_bytes=64 * 1024 * 1024),
        cost_estimate=pl.CostEstimate(
            flops=flops,
            transcendentals=transcendentals,
            bytes_accessed=bytes_accessed),
    )(data_t, w01, t01, w1p, t1p, wh, bh, zmask, eps_t)

    # ---- split the packed slab back into the module's outputs ----
    nz = n_output
    if compact:
        qz_m = slab[:B, 0:nz]
        qz_v = slab[:B, nz:2 * nz]
        untran_z = slab[:B, 2 * nz:3 * nz]
        z = slab[:B, 3 * nz:4 * nz]
        base = 4 * nz
    else:
        qz_m = slab[:B, 0:nz]
        qz_v = slab[:B, Z_PAD:Z_PAD + nz]
        untran_z = slab[:B, 2 * Z_PAD:2 * Z_PAD + nz]
        z = slab[:B, 3 * Z_PAD:3 * Z_PAD + nz]
        base = 4 * Z_PAD
    ql_m = slab[:B, base + 0:base + 1]
    ql_v = slab[:B, base + 1:base + 2]
    log_lib = slab[:B, base + 2:base + 3]
    lib = slab[:B, base + 3:base + 4]

    latent = {"z": z, "l": lib}
    untran_latent = {"z": untran_z, "l": log_lib}
    return qz_m, qz_v, ql_m, ql_v, latent, untran_latent


# -----------------------------------------------------------------------------
# Pure-JAX reference (bf16 matmuls, eval-mode BatchNorm, Dropout = identity)
# -----------------------------------------------------------------------------
def reference_forward(data, params, eps_z, eps_l):
    f32, bf16 = jnp.float32, jnp.bfloat16

    def lin(x, p):
        return jnp.dot(x.astype(bf16), p["w"].astype(bf16),
                       preferred_element_type=f32) + p["b"]

    def fc_layer(x, p):   # Linear -> BatchNorm(running stats) -> ReLU -> Dropout(id)
        h = lin(x, p)
        h = (h - p["mean"]) * jax.lax.rsqrt(p["var"] + BN_EPS) * p["gamma"] + p["beta"]
        return jnp.maximum(h, 0.0)

    h = fc_layer(data, params["enc0"])
    q = fc_layer(h, params["enc1"])
    qz_m = lin(q, params["zm"])
    qz_v = jnp.exp(lin(q, params["zv"])) + VAR_EPS
    untran_z = qz_m + jnp.sqrt(qz_v) * eps_z
    z = jax.nn.softmax(untran_z, axis=-1)
    qlh = fc_layer(data, params["lenc0"])
    ql_m = lin(qlh, params["lm"])
    ql_v = jnp.exp(lin(qlh, params["lv"])) + VAR_EPS
    log_lib = jnp.minimum(ql_m + jnp.sqrt(ql_v) * eps_l, CLAMP_MAX)
    lib = jnp.exp(log_lib)
    return qz_m, qz_v, ql_m, ql_v, {"z": z, "l": lib}, {"z": untran_z, "l": log_lib}


if __name__ == "__main__":
    B, N_INPUT, N_HIDDEN, N_OUTPUT = 8, 32, 32, 16

    key = jax.random.PRNGKey(0)
    k_data, k_params, k_ez, k_el = jax.random.split(key, 4)

    data = jax.random.uniform(k_data, (B, N_INPUT), jnp.float32)   # counts-like
    params = init_params(N_INPUT, N_OUTPUT, N_HIDDEN, k_params)
    eps_z = jax.random.normal(k_ez, (B, N_OUTPUT), jnp.float32)
    eps_l = jax.random.normal(k_el, (B, 1), jnp.float32)

    outs = encoder_totalvi_forward(data, params, eps_z, eps_l)
    qz_m, qz_v, ql_m, ql_v, latent, untran_latent = outs
    jax.block_until_ready(outs)

    # ---- sanity checks ----
    assert qz_m.shape == (B, N_OUTPUT) and qz_v.shape == (B, N_OUTPUT)
    assert ql_m.shape == (B, 1) and ql_v.shape == (B, 1)
    assert latent["z"].shape == (B, N_OUTPUT) and latent["l"].shape == (B, 1)
    assert bool(jnp.all(qz_v > 0)) and bool(jnp.all(ql_v > 0))
    assert bool(jnp.allclose(jnp.sum(latent["z"], axis=-1), 1.0, atol=1e-2))
    assert bool(jnp.all(untran_latent["l"] <= CLAMP_MAX + 1e-4))

    # ---- compare against the pure-JAX reference ----
    r_qz_m, r_qz_v, r_ql_m, r_ql_v, r_lat, r_unt = reference_forward(
        data, params, eps_z, eps_l)

    def close(a, b):
        return bool(jnp.allclose(a, b, rtol=2e-2, atol=2e-2))

    assert close(qz_m, r_qz_m)
    assert close(qz_v, r_qz_v)
    assert close(ql_m, r_ql_m)
    assert close(ql_v, r_ql_v)
    assert close(latent["z"], r_lat["z"])
    assert close(latent["l"], r_lat["l"])
    assert close(untran_latent["z"], r_unt["z"])
    assert close(untran_latent["l"], r_unt["l"])

    print("KERNEL_OK")
</pallas_src>

<mosaic_0001>
module attributes {stable_mosaic.version = 11 : i64} {
  func.func @encoder_totalvi_kernel(%arg0: i32, %arg1: memref<8x128xbf16, #tpu.memory_space<vmem>>, %arg2: memref<128x256xbf16, #tpu.memory_space<vmem>>, %arg3: memref<1x256xf32, #tpu.memory_space<vmem>>, %arg4: memref<128x128xbf16, #tpu.memory_space<vmem>>, %arg5: memref<1x128xf32, #tpu.memory_space<vmem>>, %arg6: memref<256x256xbf16, #tpu.memory_space<vmem>>, %arg7: memref<1x256xf32, #tpu.memory_space<vmem>>, %arg8: memref<1x128xf32, #tpu.memory_space<vmem>>, %arg9: memref<8x128xf32, #tpu.memory_space<vmem>>, %arg10: memref<8x128xf32, #tpu.memory_space<vmem>>) attributes {dimension_semantics = [#tpu.dimension_semantics<parallel>], iteration_bounds = array<i64: 1>, scalar_prefetch = 0 : i64, scratch_operands = 0 : i64, tpu.core_type = #tpu.core_type<tc>, window_params = [{transform_indices = @transform_0, window_bounds = array<i64: 8, 128>}, {pipeline_mode = #tpu.pipeline_mode<synchronous>, transform_indices = @transform_1, window_bounds = array<i64: 128, 256>}, {pipeline_mode = #tpu.pipeline_mode<synchronous>, transform_indices = @transform_2, window_bounds = array<i64: 1, 256>}, {pipeline_mode = #tpu.pipeline_mode<synchronous>, transform_indices = @transform_3, window_bounds = array<i64: 128, 128>}, {pipeline_mode = #tpu.pipeline_mode<synchronous>, transform_indices = @transform_4, window_bounds = array<i64: 1, 128>}, {pipeline_mode = #tpu.pipeline_mode<synchronous>, transform_indices = @transform_5, window_bounds = array<i64: 256, 256>}, {pipeline_mode = #tpu.pipeline_mode<synchronous>, transform_indices = @transform_6, window_bounds = array<i64: 1, 256>}, {pipeline_mode = #tpu.pipeline_mode<synchronous>, transform_indices = @transform_7, window_bounds = array<i64: 1, 128>}, {transform_indices = @transform_8, window_bounds = array<i64: 8, 128>}, {transform_indices = @transform_9, window_bounds = array<i64: 8, 128>}]} {
    %c0 = arith.constant 0 : index
    %c0_0 = arith.constant 0 : index
    %0 = vector.load %arg1[%c0, %c0_0] : memref<8x128xbf16, #tpu.memory_space<vmem>>, vector<8x128xbf16>
    %c0_1 = arith.constant 0 : index
    %c0_2 = arith.constant 0 : index
    %1 = vector.load %arg2[%c0_1, %c0_2] : memref<128x256xbf16, #tpu.memory_space<vmem>>, vector<128x256xbf16>
    %cst = arith.constant dense<0.000000e+00> : vector<8x256xf32>
    %2 = tpu.matmul %0, %1, %cst {dimension_numbers = #tpu.dot_dimension_numbers<[1], [0], [0], [1], [0, 0, 1, 1], [], []>} : vector<8x128xbf16>, vector<128x256xbf16>, vector<8x256xf32> -> vector<8x256xf32>
    %c0_3 = arith.constant 0 : index
    %c0_4 = arith.constant 0 : index
    %3 = vector.load %arg3[%c0_3, %c0_4] : memref<1x256xf32, #tpu.memory_space<vmem>>, vector<1x256xf32>
    %4 = vector.broadcast %3 : vector<1x256xf32> to vector<8x256xf32>
    %5 = arith.addf %2, %4 : vector<8x256xf32>
    %cst_5 = arith.constant 0.000000e+00 : f32
    %6 = vector.broadcast %cst_5 : f32 to vector<8x256xf32>
    %7 = arith.maximumf %5, %6 : vector<8x256xf32>
    %8 = vector.extract_strided_slice %7 {offsets = [0, 0], sizes = [8, 128], strides = [1, 1]} : vector<8x256xf32> to vector<8x128xf32>
    %9 = vector.extract_strided_slice %7 {offsets = [0, 128], sizes = [8, 128], strides = [1, 1]} : vector<8x256xf32> to vector<8x128xf32>
    %10 = arith.truncf %8 : vector<8x128xf32> to vector<8x128xbf16>
    %c0_6 = arith.constant 0 : index
    %c0_7 = arith.constant 0 : index
    %11 = vector.load %arg4[%c0_6, %c0_7] : memref<128x128xbf16, #tpu.memory_space<vmem>>, vector<128x128xbf16>
    %cst_8 = arith.constant dense<0.000000e+00> : vector<8x128xf32>
    %12 = tpu.matmul %10, %11, %cst_8 {dimension_numbers = #tpu.dot_dimension_numbers<[1], [0], [0], [1], [0, 0, 1, 1], [], []>} : vector<8x128xbf16>, vector<128x128xbf16>, vector<8x128xf32> -> vector<8x128xf32>
    %c0_9 = arith.constant 0 : index
    %c0_10 = arith.constant 0 : index
    %13 = vector.load %arg5[%c0_9, %c0_10] : memref<1x128xf32, #tpu.memory_space<vmem>>, vector<1x128xf32>
    %14 = vector.broadcast %13 : vector<1x128xf32> to vector<8x128xf32>
    %15 = arith.addf %12, %14 : vector<8x128xf32>
    %cst_11 = arith.constant 0.000000e+00 : f32
    %16 = vector.broadcast %cst_11 : f32 to vector<8x128xf32>
    %17 = arith.maximumf %15, %16 : vector<8x128xf32>
    %18 = tpu.concatenate %17, %9 in 1 : vector<8x128xf32>, vector<8x128xf32> -> vector<8x256xf32>
    %19 = arith.truncf %18 : vector<8x256xf32> to vector<8x256xbf16>
    %c0_12 = arith.constant 0 : index
    %c0_13 = arith.constant 0 : index
    %20 = vector.load %arg6[%c0_12, %c0_13] : memref<256x256xbf16, #tpu.memory_space<vmem>>, vector<256x256xbf16>
    %cst_14 = arith.constant dense<0.000000e+00> : vector<8x256xf32>
    %21 = tpu.matmul %19, %20, %cst_14 {dimension_numbers = #tpu.dot_dimension_numbers<[1], [0], [0], [1], [0, 0, 1, 1], [], []>} : vector<8x256xbf16>, vector<256x256xbf16>, vector<8x256xf32> -> vector<8x256xf32>
    %c0_15 = arith.constant 0 : index
    %c0_16 = arith.constant 0 : index
    %22 = vector.load %arg7[%c0_15, %c0_16] : memref<1x256xf32, #tpu.memory_space<vmem>>, vector<1x256xf32>
    %23 = vector.broadcast %22 : vector<1x256xf32> to vector<8x256xf32>
    %24 = arith.addf %21, %23 : vector<8x256xf32>
    %25 = vector.extract_strided_slice %24 {offsets = [0, 0], sizes = [8, 128], strides = [1, 1]} : vector<8x256xf32> to vector<8x128xf32>
    %26 = vector.extract_strided_slice %24 {offsets = [0, 144], sizes = [8, 1], strides = [1, 1]} : vector<8x256xf32> to vector<8x1xf32>
    %27 = vector.extract_strided_slice %24 {offsets = [0, 145], sizes = [8, 1], strides = [1, 1]} : vector<8x256xf32> to vector<8x1xf32>
    %28 = math.exp %27 : vector<8x1xf32>
    %cst_17 = arith.constant 9.99999974E-5 : f32
    %29 = vector.broadcast %cst_17 : f32 to vector<8x1xf32>
    %30 = arith.addf %28, %29 : vector<8x1xf32>
    %31 = vector.extract_strided_slice %24 {offsets = [0, 128], sizes = [8, 128], strides = [1, 1]} : vector<8x256xf32> to vector<8x128xf32>
    %32 = math.exp %31 : vector<8x128xf32>
    %cst_18 = arith.constant 9.99999974E-5 : f32
    %33 = vector.broadcast %cst_18 : f32 to vector<8x128xf32>
    %34 = arith.addf %32, %33 : vector<8x128xf32>
    %c0_19 = arith.constant 0 : index
    %c0_20 = arith.constant 0 : index
    %35 = vector.load %arg9[%c0_19, %c0_20] : memref<8x128xf32, #tpu.memory_space<vmem>>, vector<8x128xf32>
    %c0_21 = arith.constant 0 : index
    %c16 = arith.constant 16 : index
    %36 = vector.load %arg9[%c0_21, %c16] : memref<8x128xf32, #tpu.memory_space<vmem>>, vector<8x1xf32>
    %37 = math.sqrt %34 : vector<8x128xf32>
    %38 = arith.mulf %37, %35 : vector<8x128xf32>
    %39 = arith.addf %25, %38 : vector<8x128xf32>
    %c0_22 = arith.constant 0 : index
    %c0_23 = arith.constant 0 : index
    %40 = vector.load %arg8[%c0_22, %c0_23] : memref<1x128xf32, #tpu.memory_space<vmem>>, vector<1x128xf32>
    %41 = vector.broadcast %40 : vector<1x128xf32> to vector<8x128xf32>
    %42 = arith.addf %39, %41 : vector<8x128xf32>
    %cst_24 = arith.constant dense<0xFF800000> : vector<8xf32>
    %43 = vector.multi_reduction <maximumf>, %42, %cst_24 [1] : vector<8x128xf32> to vector<8xf32>
    %44 = vector.shape_cast %43 : vector<8xf32> to vector<8x1xf32>
    %45 = vector.broadcast %44 : vector<8x1xf32> to vector<8x128xf32>
    %46 = arith.subf %42, %45 : vector<8x128xf32>
    %47 = math.exp %46 : vector<8x128xf32>
    %cst_25 = arith.constant dense<0.000000e+00> : vector<8xf32>
    %48 = vector.multi_reduction <add>, %47, %cst_25 [1] : vector<8x128xf32> to vector<8xf32>
    %49 = vector.shape_cast %48 : vector<8xf32> to vector<8x1xf32>
    %50 = tpu.reciprocal %49 {approx = true} : vector<8x1xf32> -> vector<8x1xf32>
    %51 = vector.broadcast %50 : vector<8x1xf32> to vector<8x128xf32>
    %52 = arith.mulf %47, %51 : vector<8x128xf32>
    %53 = math.sqrt %30 : vector<8x1xf32>
    %54 = arith.mulf %53, %36 : vector<8x1xf32>
    %55 = arith.addf %26, %54 : vector<8x1xf32>
    %cst_26 = arith.constant 1.500000e+01 : f32
    %56 = vector.broadcast %cst_26 : f32 to vector<8x1xf32>
    %57 = arith.minimumf %55, %56 : vector<8x1xf32>
    %58 = math.exp %57 : vector<8x1xf32>
    %59 = tpu.iota {dimensions = array<i32: 1>} : vector<8x128xi32>
    %c0_i32 = arith.constant 0 : i32
    %60 = vector.broadcast %c0_i32 : i32 to vector<8x128xi32>
    %61 = arith.cmpi sge, %59, %60 : vector<8x128xi32>
    %c16_i32 = arith.constant 16 : i32
    %62 = vector.broadcast %c16_i32 : i32 to vector<8x128xi32>
    %63 = arith.cmpi slt, %59, %62 : vector<8x128xi32>
    %64 = arith.andi %61, %63 : vector<8x128xi1>
    %cst_27 = arith.constant 0.000000e+00 : f32
    %65 = vector.broadcast %cst_27 : f32 to vector<8x128xf32>
    %66 = arith.select %64, %25, %65 : vector<8x128xi1>, vector<8x128xf32>
    %c16_i32_28 = arith.constant 16 : i32
    %67 = tpu.dynamic_rotate %34 by %c16_i32_28 dim 1 : vector<8x128xf32>, i32 -> vector<8x128xf32>
    %c16_i32_29 = arith.constant 16 : i32
    %68 = vector.broadcast %c16_i32_29 : i32 to vector<8x128xi32>
    %69 = arith.cmpi sge, %59, %68 : vector<8x128xi32>
    %c32_i32 = arith.constant 32 : i32
    %70 = vector.broadcast %c32_i32 : i32 to vector<8x128xi32>
    %71 = arith.cmpi slt, %59, %70 : vector<8x128xi32>
    %72 = arith.andi %69, %71 : vector<8x128xi1>
    %cst_30 = arith.constant 0.000000e+00 : f32
    %73 = vector.broadcast %cst_30 : f32 to vector<8x128xf32>
    %74 = arith.select %72, %67, %73 : vector<8x128xi1>, vector<8x128xf32>
    %75 = arith.addf %66, %74 : vector<8x128xf32>
    %c32_i32_31 = arith.constant 32 : i32
    %76 = tpu.dynamic_rotate %39 by %c32_i32_31 dim 1 : vector<8x128xf32>, i32 -> vector<8x128xf32>
    %c32_i32_32 = arith.constant 32 : i32
    %77 = vector.broadcast %c32_i32_32 : i32 to vector<8x128xi32>
    %78 = arith.cmpi sge, %59, %77 : vector<8x128xi32>
    %c48_i32 = arith.constant 48 : i32
    %79 = vector.broadcast %c48_i32 : i32 to vector<8x128xi32>
    %80 = arith.cmpi slt, %59, %79 : vector<8x128xi32>
    %81 = arith.andi %78, %80 : vector<8x128xi1>
    %cst_33 = arith.constant 0.000000e+00 : f32
    %82 = vector.broadcast %cst_33 : f32 to vector<8x128xf32>
    %83 = arith.select %81, %76, %82 : vector<8x128xi1>, vector<8x128xf32>
    %84 = arith.addf %75, %83 : vector<8x128xf32>
    %c48_i32_34 = arith.constant 48 : i32
    %85 = tpu.dynamic_rotate %52 by %c48_i32_34 dim 1 : vector<8x128xf32>, i32 -> vector<8x128xf32>
    %c48_i32_35 = arith.constant 48 : i32
    %86 = vector.broadcast %c48_i32_35 : i32 to vector<8x128xi32>
    %87 = arith.cmpi sge, %59, %86 : vector<8x128xi32>
    %c64_i32 = arith.constant 64 : i32
    %88 = vector.broadcast %c64_i32 : i32 to vector<8x128xi32>
    %89 = arith.cmpi slt, %59, %88 : vector<8x128xi32>
    %90 = arith.andi %87, %89 : vector<8x128xi1>
    %cst_36 = arith.constant 0.000000e+00 : f32
    %91 = vector.broadcast %cst_36 : f32 to vector<8x128xf32>
    %92 = arith.select %90, %85, %91 : vector<8x128xi1>, vector<8x128xf32>
    %93 = arith.addf %84, %92 : vector<8x128xf32>
    %c64_i32_37 = arith.constant 64 : i32
    %94 = vector.broadcast %c64_i32_37 : i32 to vector<8x128xi32>
    %95 = arith.cmpi eq, %59, %94 : vector<8x128xi32>
    %cst_38 = arith.constant 0.000000e+00 : f32
    %96 = vector.shape_cast %26 : vector<8x1xf32> to vector<8x1xf32>
    %97 = vector.broadcast %96 : vector<8x1xf32> to vector<8x128xf32>
    %98 = vector.broadcast %cst_38 : f32 to vector<8x128xf32>
    %99 = arith.select %95, %97, %98 : vector<8x128xi1>, vector<8x128xf32>
    %100 = arith.addf %93, %99 : vector<8x128xf32>
    %c65_i32 = arith.constant 65 : i32
    %101 = vector.broadcast %c65_i32 : i32 to vector<8x128xi32>
    %102 = arith.cmpi eq, %59, %101 : vector<8x128xi32>
    %cst_39 = arith.constant 0.000000e+00 : f32
    %103 = vector.shape_cast %30 : vector<8x1xf32> to vector<8x1xf32>
    %104 = vector.broadcast %103 : vector<8x1xf32> to vector<8x128xf32>
    %105 = vector.broadcast %cst_39 : f32 to vector<8x128xf32>
    %106 = arith.select %102, %104, %105 : vector<8x128xi1>, vector<8x128xf32>
    %107 = arith.addf %100, %106 : vector<8x128xf32>
    %c66_i32 = arith.constant 66 : i32
    %108 = vector.broadcast %c66_i32 : i32 to vector<8x128xi32>
    %109 = arith.cmpi eq, %59, %108 : vector<8x128xi32>
    %cst_40 = arith.constant 0.000000e+00 : f32
    %110 = vector.shape_cast %57 : vector<8x1xf32> to vector<8x1xf32>
    %111 = vector.broadcast %110 : vector<8x1xf32> to vector<8x128xf32>
    %112 = vector.broadcast %cst_40 : f32 to vector<8x128xf32>
    %113 = arith.select %109, %111, %112 : vector<8x128xi1>, vector<8x128xf32>
    %114 = arith.addf %107, %113 : vector<8x128xf32>
    %c67_i32 = arith.constant 67 : i32
    %115 = vector.broadcast %c67_i32 : i32 to vector<8x128xi32>
    %116 = arith.cmpi eq, %59, %115 : vector<8x128xi32>
    %cst_41 = arith.constant 0.000000e+00 : f32
    %117 = vector.shape_cast %58 : vector<8x1xf32> to vector<8x1xf32>
    %118 = vector.broadcast %117 : vector<8x1xf32> to vector<8x128xf32>
    %119 = vector.broadcast %cst_41 : f32 to vector<8x128xf32>
    %120 = arith.select %116, %118, %119 : vector<8x128xi1>, vector<8x128xf32>
    %121 = arith.addf %114, %120 : vector<8x128xf32>
    %c0_42 = arith.constant 0 : index
    %c0_43 = arith.constant 0 : index
    %122 = vector.load %arg10[%c0_42, %c0_43] : memref<8x128xf32, #tpu.memory_space<vmem>>, vector<8x128xf32>
    tpu.vector_store %arg10[%c0_42, %c0_43], %121 {strides = array<i32>} : memref<8x128xf32, #tpu.memory_space<vmem>>, vector<8x128xf32>,
    return
  }
  func.func @transform_0(%arg0: i32) -> (i32, i32) {
    %c0_i32 = arith.constant 0 : i32
    %c0_i32_0 = arith.constant 0 : i32
    return %arg0, %c0_i32 : i32, i32
  }
  func.func @transform_1(%arg0: i32) -> (i32, i32) {
    %c0_i32 = arith.constant 0 : i32
    %c0_i32_0 = arith.constant 0 : i32
    %c0_i32_1 = arith.constant 0 : i32
    return %c0_i32, %c0_i32_0 : i32, i32
  }
  func.func @transform_2(%arg0: i32) -> (i32, i32) {
    %c0_i32 = arith.constant 0 : i32
    %c0_i32_0 = arith.constant 0 : i32
    %c0_i32_1 = arith.constant 0 : i32
    return %c0_i32, %c0_i32_0 : i32, i32
  }
  func.func @transform_3(%arg0: i32) -> (i32, i32) {
    %c0_i32 = arith.constant 0 : i32
    %c0_i32_0 = arith.constant 0 : i32
    %c0_i32_1 = arith.constant 0 : i32
    return %c0_i32, %c0_i32_0 : i32, i32
  }
  func.func @transform_4(%arg0: i32) -> (i32, i32) {
    %c0_i32 = arith.constant 0 : i32
    %c0_i32_0 = arith.constant 0 : i32
    %c0_i32_1 = arith.constant 0 : i32
    return %c0_i32, %c0_i32_0 : i32, i32
  }
  func.func @transform_5(%arg0: i32) -> (i32, i32) {
    %c0_i32 = arith.constant 0 : i32
    %c0_i32_0 = arith.constant 0 : i32
    %c0_i32_1 = arith.constant 0 : i32
    return %c0_i32, %c0_i32_0 : i32, i32
  }
  func.func @transform_6(%arg0: i32) -> (i32, i32) {
    %c0_i32 = arith.constant 0 : i32
    %c0_i32_0 = arith.constant 0 : i32
    %c0_i32_1 = arith.constant 0 : i32
    return %c0_i32, %c0_i32_0 : i32, i32
  }
  func.func @transform_7(%arg0: i32) -> (i32, i32) {
    %c0_i32 = arith.constant 0 : i32
    %c0_i32_0 = arith.constant 0 : i32
    %c0_i32_1 = arith.constant 0 : i32
    return %c0_i32, %c0_i32_0 : i32, i32
  }
  func.func @transform_8(%arg0: i32) -> (i32, i32) {
    %c0_i32 = arith.constant 0 : i32
    %c0_i32_0 = arith.constant 0 : i32
    return %arg0, %c0_i32 : i32, i32
  }
  func.func @transform_9(%arg0: i32) -> (i32, i32) {
    %c0_i32 = arith.constant 0 : i32
    %c0_i32_0 = arith.constant 0 : i32
    return %arg0, %c0_i32 : i32, i32
  }
}

</mosaic_0001>

<llo_original>
// kernel: encoder_totalvi_forward.1
$region0: #{encoder_totalvi_forward.1}
  #allocation0 [shape = 'u32[]', space=smem, size = 0x4, offset = 0x4, fixed_abs, tag = 'smem constant byte address 0x4 - core index']
  #allocation1 [shape = 'u32[144,128]{1,0:T(1,128)}', space=vmem, size = 0x12000, scoped, tag = 'internal scratch']
  %s0 = inlined_call_operand.vmem [shape: bf16[8,128], index: 0, kind: input, shape index: {}]
  %s1 = inlined_call_operand.vmem [shape: bf16[128,256], index: 1, kind: input, shape index: {}]
  %s2 = inlined_call_operand.vmem [shape: f32[1,256], index: 2, kind: input, shape index: {}]
  %s3 = inlined_call_operand.vmem [shape: bf16[128,128], index: 3, kind: input, shape index: {}]
  %s4 = inlined_call_operand.vmem [shape: f32[1,128], index: 4, kind: input, shape index: {}]
  %s5 = inlined_call_operand.vmem [shape: bf16[256,256], index: 5, kind: input, shape index: {}]
  %s6 = inlined_call_operand.vmem [shape: f32[1,256], index: 6, kind: input, shape index: {}]
  %s7 = inlined_call_operand.vmem [shape: f32[1,128], index: 7, kind: input, shape index: {}]
  %s8 = inlined_call_operand.vmem [shape: f32[8,128], index: 8, kind: input, shape index: {}]
  %s9 = inlined_call_operand.vmem [shape: f32[8,128], index: 9, kind: output, shape index: {}]
  %s10 = sld [smem:[#allocation0]]
  $region46: #{encoder_totalvi_forward.1} parent=0
    _
  %s12 = ssub.s32 1, %s10
  %s13 = scalar_select 0, %s12, %s10
  // Predicated region
  $region2: #{encoder_totalvi_forward.1} parent=0 // pred_check
    _
  $region3: #{encoder_totalvi_forward.1} parent=0 // pred_check_branch
    %15 = sbr.rel (0) target = $region5
  $region4: #{encoder_totalvi_forward.1} parent=0 // pred_region
    _
  $region5: #{encoder_totalvi_forward.1} parent=0 // pred_fallthru
    _
  // Predicated region
  $region6: #{encoder_totalvi_forward.1} parent=0 // pred_check
    _
  $region7: #{encoder_totalvi_forward.1} parent=0 // pred_check_branch
    %17 = sbr.rel (0) target = $region9
  $region8: #{encoder_totalvi_forward.1} parent=0 // pred_region
    _
  $region9: #{encoder_totalvi_forward.1} parent=0 // pred_fallthru
    _
  // Predicated region
  $region10: #{encoder_totalvi_forward.1} parent=0 // pred_check
    _
  $region11: #{encoder_totalvi_forward.1} parent=0 // pred_check_branch
    %19 = sbr.rel (0) target = $region13
  $region12: #{encoder_totalvi_forward.1} parent=0 // pred_region
    _
  $region13: #{encoder_totalvi_forward.1} parent=0 // pred_fallthru
    _
  // Predicated region
  $region14: #{encoder_totalvi_forward.1} parent=0 // pred_check
    _
  $region15: #{encoder_totalvi_forward.1} parent=0 // pred_check_branch
    %21 = sbr.rel (0) target = $region17
  $region16: #{encoder_totalvi_forward.1} parent=0 // pred_region
    _
  $region17: #{encoder_totalvi_forward.1} parent=0 // pred_fallthru
    _
  // Predicated region
  $region18: #{encoder_totalvi_forward.1} parent=0 // pred_check
    _
  $region19: #{encoder_totalvi_forward.1} parent=0 // pred_check_branch
    %23 = sbr.rel (0) target = $region21
  $region20: #{encoder_totalvi_forward.1} parent=0 // pred_region
    _
  $region21: #{encoder_totalvi_forward.1} parent=0 // pred_fallthru
    _
  // Predicated region
  $region22: #{encoder_totalvi_forward.1} parent=0 // pred_check
    _
  $region23: #{encoder_totalvi_forward.1} parent=0 // pred_check_branch
    %25 = sbr.rel (0) target = $region25
  $region24: #{encoder_totalvi_forward.1} parent=0 // pred_region
    _
  $region25: #{encoder_totalvi_forward.1} parent=0 // pred_fallthru
    _
  // Predicated region
  $region26: #{encoder_totalvi_forward.1} parent=0 // pred_check
    _
  $region27: #{encoder_totalvi_forward.1} parent=0 // pred_check_branch
    %27 = sbr.rel (0) target = $region29
  $region28: #{encoder_totalvi_forward.1} parent=0 // pred_region
    _
  $region29: #{encoder_totalvi_forward.1} parent=0 // pred_fallthru
    _
  // Predicated region
  $region30: #{encoder_totalvi_forward.1} parent=0 // pred_check
    _
  $region31: #{encoder_totalvi_forward.1} parent=0 // pred_check_branch
    %29 = sbr.rel (0) target = $region33
  $region32: #{encoder_totalvi_forward.1} parent=0 // pred_region
    _
  $region33: #{encoder_totalvi_forward.1} parent=0 // pred_fallthru
    _
  // Predicated region
  $region34: #{encoder_totalvi_forward.1} parent=0 // pred_check
    _
  $region35: #{encoder_totalvi_forward.1} parent=0 // pred_check_branch
    %31 = sbr.rel (0) target = $region37
  $region36: #{encoder_totalvi_forward.1} parent=0 // pred_region
    _
  $region37: #{encoder_totalvi_forward.1} parent=0 // pred_fallthru
    _
  %v33 = vld [vmem:[%s0] sm:$0xf]
  %v34 = vld [vmem:[%s1] sm:$0xff]
  %v35 = vld [vmem:[%s1 + $0x8] sm:$0xff]
  %v36 = vld [vmem:[%s1 + $0x10] sm:$0xff]
  %v37 = vld [vmem:[%s1 + $0x18] sm:$0xff]
  %v38 = vld [vmem:[%s1 + $0x20] sm:$0xff]
  %v39 = vld [vmem:[%s1 + $0x28] sm:$0xff]
  %v40 = vld [vmem:[%s1 + $0x30] sm:$0xff]
  %v41 = vld [vmem:[%s1 + $0x38] sm:$0xff]
  %v42 = vld [vmem:[%s1 + $0x40] sm:$0xff]
  %v43 = vld [vmem:[%s1 + $0x48] sm:$0xff]
  %v44 = vld [vmem:[%s1 + $0x50] sm:$0xff]
  %v45 = vld [vmem:[%s1 + $0x58] sm:$0xff]
  %v46 = vld [vmem:[%s1 + $0x60] sm:$0xff]
  %v47 = vld [vmem:[%s1 + $0x68] sm:$0xff]
  %v48 = vld [vmem:[%s1 + $0x70] sm:$0xff]
  %v49 = vld [vmem:[%s1 + $0x78] sm:$0xff]
  %v50 = vld [vmem:[%s2] sm:$0x3]
  %v52 = vlaneseq
  %v53 = vshrl.u32 %v52, 7
  %v54 = vsub.s32 0, %v53
  %v55 = vrot.slane %v50, %v54
  %v56 = vlaneseq
  %v57 = vshrl.u32 %v56, 7
  %v58 = vsub.s32 1, %v57
  %v59 = vrot.slane %v50, %v58
  %v78 = vunpack.c.l.b16 %v34
  %v79 = vunpack.c.h.b16 %v34
  %v80 = vunpack.c.l.b16 %v35
  %v81 = vunpack.c.h.b16 %v35
  %v82 = vunpack.c.l.b16 %v36
  %v83 = vunpack.c.h.b16 %v36
  %v84 = vunpack.c.l.b16 %v37
  %v85 = vunpack.c.h.b16 %v37
  %v86 = vunpack.c.l.b16 %v38
  %v87 = vunpack.c.h.b16 %v38
  %v88 = vunpack.c.l.b16 %v39
  %v89 = vunpack.c.h.b16 %v39
  %v90 = vunpack.c.l.b16 %v40
  %v91 = vunpack.c.h.b16 %v40
  %v92 = vunpack.c.l.b16 %v41
  %v93 = vunpack.c.h.b16 %v41
  %v94 = vunpack.c.l.b16 %v42
  %v95 = vunpack.c.h.b16 %v42
  %v96 = vunpack.c.l.b16 %v43
  %v97 = vunpack.c.h.b16 %v43
  %v98 = vunpack.c.l.b16 %v44
  %v99 = vunpack.c.h.b16 %v44
  %v100 = vunpack.c.l.b16 %v45
  %v101 = vunpack.c.h.b16 %v45
  %v102 = vunpack.c.l.b16 %v46
  %v103 = vunpack.c.h.b16 %v46
  %v104 = vunpack.c.l.b16 %v47
  %v105 = vunpack.c.h.b16 %v47
  %v106 = vunpack.c.l.b16 %v48
  %v107 = vunpack.c.h.b16 %v48
  %v108 = vunpack.c.l.b16 %v49
  %v109 = vunpack.c.h.b16 %v49
  %v110 = vpack.c.b16 %v80, %v78
  %v111 = vpack.c.b16 %v81, %v79
  %v112 = vpack.c.b16 %v84, %v82
  %v113 = vpack.c.b16 %v85, %v83
  %v114 = vpack.c.b16 %v88, %v86
  %v115 = vpack.c.b16 %v89, %v87
  %v116 = vpack.c.b16 %v92, %v90
  %v117 = vpack.c.b16 %v93, %v91
  %v118 = vpack.c.b16 %v96, %v94
  %v119 = vpack.c.b16 %v97, %v95
  %v120 = vpack.c.b16 %v100, %v98
  %v121 = vpack.c.b16 %v101, %v99
  %v122 = vpack.c.b16 %v104, %v102
  %v123 = vpack.c.b16 %v105, %v103
  %v124 = vpack.c.b16 %v108, %v106
  %v125 = vpack.c.b16 %v109, %v107
  %142 = vmatprep.subr.bf16.mxu0 %v125
  %143 = vmatpush1.bf16.msra.mxu0 %v124
  %144 = vmatprep.subr.bf16.mxu0 %v123
  %145 = vmatpush1.bf16.msra.mxu0 %v122
  %146 = vmatprep.subr.bf16.mxu0 %v121
  %147 = vmatpush1.bf16.msra.mxu0 %v120
  %148 = vmatprep.subr.bf16.mxu0 %v119
  %149 = vmatpush1.bf16.msra.mxu0 %v118
  %150 = vmatprep.subr.bf16.mxu0 %v117
  %151 = vmatpush1.bf16.msra.mxu0 %v116
  %152 = vmatprep.subr.bf16.mxu0 %v115
  %153 = vmatpush1.bf16.msra.mxu0 %v114
  %154 = vmatprep.subr.bf16.mxu0 %v113
  %155 = vmatpush1.bf16.msra.mxu0 %v112
  %156 = vmatprep.subr.bf16.mxu0 %v111
  %157 = vmatpush1.bf16.msra.mxu0 %v110
  %158 = vmatprep.subr.bf16.mxu0 0
  %159 = vmatpush2.bf16.msra.mxu0 0
  %160 = vmatprep.subr.bf16.mxu0 0
  %161 = vmatpush2.bf16.msra.mxu0 0
  %162 = vmatprep.subr.bf16.mxu0 0
  %163 = vmatpush2.bf16.msra.mxu0 0
  %164 = vmatprep.subr.bf16.mxu0 0
  %165 = vmatpush2.bf16.msra.mxu0 0
  %166 = vmatprep.subr.bf16.mxu0 0
  %167 = vmatpush2.bf16.msra.mxu0 0
  %168 = vmatprep.subr.bf16.mxu0 0
  %169 = vmatpush2.bf16.msra.mxu0 0
  %170 = vmatprep.subr.bf16.mxu0 0
  %171 = vmatpush2.bf16.msra.mxu0 0
  %172 = vmatprep.subr.bf16.mxu0 0
  %173 = vmatpush2.bf16.msra.mxu0 0
  %174 = vmatprep.mubr.bf16.mxu0 0
  %175 = vmatmul.mubr.bf16.gmra.mxu0 %v33
  %v176 = vpop.f32.mrf.mxu0
  %v177 = vadd.f32 %v55, %v176
  %v178 = vpop.f32.mrf.mxu0
  %v179 = vadd.f32 %v59, %v178
  %v180 = vpop.f32.mrf.mxu0
  %v181 = vpop.f32.mrf.mxu0
  %182 = vdwg.mxu0
  %v183 = vmax.f32 %v177, 0.0
  %v184 = vmax.f32 %v179, 0.0
  %v185 = vpack.c.bf16 %v183, %v183
  %v186 = vld [vmem:[%s3] sm:$0xf]
  %v187 = vld [vmem:[%s3 + $0x4] sm:$0xf]
  %v188 = vld [vmem:[%s3 + $0x8] sm:$0xf]
  %v189 = vld [vmem:[%s3 + $0xc] sm:$0xf]
  %v190 = vld [vmem:[%s3 + $0x10] sm:$0xf]
  %v191 = vld [vmem:[%s3 + $0x14] sm:$0xf]
  %v192 = vld [vmem:[%s3 + $0x18] sm:$0xf]
  %v193 = vld [vmem:[%s3 + $0x1c] sm:$0xf]
  %v194 = vld [vmem:[%s3 + $0x20] sm:$0xf]
  %v195 = vld [vmem:[%s3 + $0x24] sm:$0xf]
  %v196 = vld [vmem:[%s3 + $0x28] sm:$0xf]
  %v197 = vld [vmem:[%s3 + $0x2c] sm:$0xf]
  %v198 = vld [vmem:[%s3 + $0x30] sm:$0xf]
  %v199 = vld [vmem:[%s3 + $0x34] sm:$0xf]
  %v200 = vld [vmem:[%s3 + $0x38] sm:$0xf]
  %v201 = vld [vmem:[%s3 + $0x3c] sm:$0xf]
  %v202 = vld [vmem:[%s4] sm:$0x1]
  %v204 = vlaneseq
  %v205 = vshrl.u32 %v204, 7
  %v206 = vsub.s32 0, %v205
  %v207 = vrot.slane %v202, %v206
  %v225 = vunpack.c.l.b16 %v186
  %v226 = vunpack.c.l.b16 %v187
  %v227 = vunpack.c.l.b16 %v188
  %v228 = vunpack.c.l.b16 %v189
  %v229 = vunpack.c.l.b16 %v190
  %v230 = vunpack.c.l.b16 %v191
  %v231 = vunpack.c.l.b16 %v192
  %v232 = vunpack.c.l.b16 %v193
  %v233 = vunpack.c.l.b16 %v194
  %v234 = vunpack.c.l.b16 %v195
  %v235 = vunpack.c.l.b16 %v196
  %v236 = vunpack.c.l.b16 %v197
  %v237 = vunpack.c.l.b16 %v198
  %v238 = vunpack.c.l.b16 %v199
  %v239 = vunpack.c.l.b16 %v200
  %v240 = vunpack.c.l.b16 %v201
  %v241 = vpack.c.b16 %v226, %v225
  %v242 = vpack.c.b16 %v228, %v227
  %v243 = vpack.c.b16 %v230, %v229
  %v244 = vpack.c.b16 %v232, %v231
  %v245 = vpack.c.b16 %v234, %v233
  %v246 = vpack.c.b16 %v236, %v235
  %v247 = vpack.c.b16 %v238, %v237
  %v248 = vpack.c.b16 %v240, %v239
  %257 = vmatprep.subr.bf16.mxu0 0
  %258 = vmatpush1.bf16.msra.mxu0 %v248
  %259 = vmatprep.subr.bf16.mxu0 0
  %260 = vmatpush1.bf16.msra.mxu0 %v247
  %261 = vmatprep.subr.bf16.mxu0 0
  %262 = vmatpush1.bf16.msra.mxu0 %v246
  %263 = vmatprep.subr.bf16.mxu0 0
  %264 = vmatpush1.bf16.msra.mxu0 %v245
  %265 = vmatprep.subr.bf16.mxu0 0
  %266 = vmatpush1.bf16.msra.mxu0 %v244
  %267 = vmatprep.subr.bf16.mxu0 0
  %268 = vmatpush1.bf16.msra.mxu0 %v243
  %269 = vmatprep.subr.bf16.mxu0 0
  %270 = vmatpush1.bf16.msra.mxu0 %v242
  %271 = vmatprep.subr.bf16.mxu0 0
  %272 = vmatpush1.bf16.msra.mxu0 %v241
  %273 = vmatprep.subr.bf16.mxu0 0
  %274 = vmatpush2.bf16.msra.mxu0 0
  %275 = vmatprep.subr.bf16.mxu0 0
  %276 = vmatpush2.bf16.msra.mxu0 0
  %277 = vmatprep.subr.bf16.mxu0 0
  %278 = vmatpush2.bf16.msra.mxu0 0
  %279 = vmatprep.subr.bf16.mxu0 0
  %280 = vmatpush2.bf16.msra.mxu0 0
  %281 = vmatprep.subr.bf16.mxu0 0
  %282 = vmatpush2.bf16.msra.mxu0 0
  %283 = vmatprep.subr.bf16.mxu0 0
  %284 = vmatpush2.bf16.msra.mxu0 0
  %285 = vmatprep.subr.bf16.mxu0 0
  %286 = vmatpush2.bf16.msra.mxu0 0
  %287 = vmatprep.subr.bf16.mxu0 0
  %288 = vmatpush2.bf16.msra.mxu0 0
  %289 = vmatprep.mubr.bf16.mxu0 0
  %290 = vmatmul.mubr.bf16.gmra.mxu0 %v185
  %v291 = vpop.f32.mrf.mxu0
  %v292 = vadd.f32 %v207, %v291
  %v293 = vpop.f32.mrf.mxu0
  %v294 = vpop.f32.mrf.mxu0
  %v295 = vpop.f32.mrf.mxu0
  %296 = vdwg.mxu0
  %v297 = vmax.f32 %v292, 0.0
  %v298 = vpack.c.bf16 %v297, %v297
  %v299 = vpack.c.bf16 %v184, %v184
  %v300 = vld [vmem:[%s5] sm:$0xff]
  %v301 = vld [vmem:[%s5 + $0x8] sm:$0xff]
  %v302 = vld [vmem:[%s5 + $0x10] sm:$0xff]
  %v303 = vld [vmem:[%s5 + $0x18] sm:$0xff]
  %v304 = vld [vmem:[%s5 + $0x20] sm:$0xff]
  %v305 = vld [vmem:[%s5 + $0x28] sm:$0xff]
  %v306 = vld [vmem:[%s5 + $0x30] sm:$0xff]
  %v307 = vld [vmem:[%s5 + $0x38] sm:$0xff]
  %v308 = vld [vmem:[%s5 + $0x40] sm:$0xff]
  %v309 = vld [vmem:[%s5 + $0x48] sm:$0xff]
  %v310 = vld [vmem:[%s5 + $0x50] sm:$0xff]
  %v311 = vld [vmem:[%s5 + $0x58] sm:$0xff]
  %v312 = vld [vmem:[%s5 + $0x60] sm:$0xff]
  %v313 = vld [vmem:[%s5 + $0x68] sm:$0xff]
  %v314 = vld [vmem:[%s5 + $0x70] sm:$0xff]
  %v315 = vld [vmem:[%s5 + $0x78] sm:$0xff]
  %v316 = vld [vmem:[%s5 + $0x80] sm:$0xff]
  %v317 = vld [vmem:[%s5 + $0x88] sm:$0xff]
  %v318 = vld [vmem:[%s5 + $0x90] sm:$0xff]
  %v319 = vld [vmem:[%s5 + $0x98] sm:$0xff]
  %v320 = vld [vmem:[%s5 + $0xa0] sm:$0xff]
  %v321 = vld [vmem:[%s5 + $0xa8] sm:$0xff]
  %v322 = vld [vmem:[%s5 + $0xb0] sm:$0xff]
  %v323 = vld [vmem:[%s5 + $0xb8] sm:$0xff]
  %v324 = vld [vmem:[%s5 + $0xc0] sm:$0xff]
  %v325 = vld [vmem:[%s5 + $0xc8] sm:$0xff]
  %v326 = vld [vmem:[%s5 + $0xd0] sm:$0xff]
  %v327 = vld [vmem:[%s5 + $0xd8] sm:$0xff]
  %v328 = vld [vmem:[%s5 + $0xe0] sm:$0xff]
  %v329 = vld [vmem:[%s5 + $0xe8] sm:$0xff]
  %v330 = vld [vmem:[%s5 + $0xf0] sm:$0xff]
  %v331 = vld [vmem:[%s5 + $0xf8] sm:$0xff]
  %v332 = vld [vmem:[%s6] sm:$0x3]
  %v334 = vlaneseq
  %v335 = vshrl.u32 %v334, 7
  %v336 = vsub.s32 0, %v335
  %v337 = vrot.slane %v332, %v336
  %v338 = vlaneseq
  %v339 = vshrl.u32 %v338, 7
  %v340 = vsub.s32 1, %v339
  %v341 = vrot.slane %v332, %v340
  %v376 = vunpack.c.l.b16 %v300
  %v377 = vunpack.c.h.b16 %v300
  %v378 = vunpack.c.l.b16 %v301
  %v379 = vunpack.c.h.b16 %v301
  %v380 = vunpack.c.l.b16 %v302
  %v381 = vunpack.c.h.b16 %v302
  %v382 = vunpack.c.l.b16 %v303
  %v383 = vunpack.c.h.b16 %v303
  %v384 = vunpack.c.l.b16 %v304
  %v385 = vunpack.c.h.b16 %v304
  %v386 = vunpack.c.l.b16 %v305
  %v387 = vunpack.c.h.b16 %v305
  %v388 = vunpack.c.l.b16 %v306
  %v389 = vunpack.c.h.b16 %v306
  %v390 = vunpack.c.l.b16 %v307
  %v391 = vunpack.c.h.b16 %v307
  %v392 = vunpack.c.l.b16 %v308
  %v393 = vunpack.c.h.b16 %v308
  %v394 = vunpack.c.l.b16 %v309
  %v395 = vunpack.c.h.b16 %v309
  %v396 = vunpack.c.l.b16 %v310
  %v397 = vunpack.c.h.b16 %v310
  %v398 = vunpack.c.l.b16 %v311
  %v399 = vunpack.c.h.b16 %v311
  %v400 = vunpack.c.l.b16 %v312
  %v401 = vunpack.c.h.b16 %v312
  %v402 = vunpack.c.l.b16 %v313
  %v403 = vunpack.c.h.b16 %v313
  %v404 = vunpack.c.l.b16 %v314
  %v405 = vunpack.c.h.b16 %v314
  %v406 = vunpack.c.l.b16 %v315
  %v407 = vunpack.c.h.b16 %v315
  %v408 = vunpack.c.l.b16 %v316
  %v409 = vunpack.c.h.b16 %v316
  %v410 = vunpack.c.l.b16 %v317
  %v411 = vunpack.c.h.b16 %v317
  %v412 = vunpack.c.l.b16 %v318
  %v413 = vunpack.c.h.b16 %v318
  %v414 = vunpack.c.l.b16 %v319
  %v415 = vunpack.c.h.b16 %v319
  %v416 = vunpack.c.l.b16 %v320
  %v417 = vunpack.c.h.b16 %v320
  %v418 = vunpack.c.l.b16 %v321
  %v419 = vunpack.c.h.b16 %v321
  %v420 = vunpack.c.l.b16 %v322
  %v421 = vunpack.c.h.b16 %v322
  %v422 = vunpack.c.l.b16 %v323
  %v423 = vunpack.c.h.b16 %v323
  %v424 = vunpack.c.l.b16 %v324
  %v425 = vunpack.c.h.b16 %v324
  %v426 = vunpack.c.l.b16 %v325
  %v427 = vunpack.c.h.b16 %v325
  %v428 = vunpack.c.l.b16 %v326
  %v429 = vunpack.c.h.b16 %v326
  %v430 = vunpack.c.l.b16 %v327
  %v431 = vunpack.c.h.b16 %v327
  %v432 = vunpack.c.l.b16 %v328
  %v433 = vunpack.c.h.b16 %v328
  %v434 = vunpack.c.l.b16 %v329
  %v435 = vunpack.c.h.b16 %v329
  %v436 = vunpack.c.l.b16 %v330
  %v437 = vunpack.c.h.b16 %v330
  %v438 = vunpack.c.l.b16 %v331
  %v439 = vunpack.c.h.b16 %v331
  %v440 = vpack.c.b16 %v378, %v376
  %v441 = vpack.c.b16 %v379, %v377
  %v442 = vpack.c.b16 %v382, %v380
  %v443 = vpack.c.b16 %v383, %v381
  %v444 = vpack.c.b16 %v386, %v384
  %v445 = vpack.c.b16 %v387, %v385
  %v446 = vpack.c.b16 %v390, %v388
  %v447 = vpack.c.b16 %v391, %v389
  %v448 = vpack.c.b16 %v394, %v392
  %v449 = vpack.c.b16 %v395, %v393
  %v450 = vpack.c.b16 %v398, %v396
  %v451 = vpack.c.b16 %v399, %v397
  %v452 = vpack.c.b16 %v402, %v400
  %v453 = vpack.c.b16 %v403, %v401
  %v454 = vpack.c.b16 %v406, %v404
  %v455 = vpack.c.b16 %v407, %v405
  %v456 = vpack.c.b16 %v410, %v408
  %v457 = vpack.c.b16 %v411, %v409
  %v458 = vpack.c.b16 %v414, %v412
  %v459 = vpack.c.b16 %v415, %v413
  %v460 = vpack.c.b16 %v418, %v416
  %v461 = vpack.c.b16 %v419, %v417
  %v462 = vpack.c.b16 %v422, %v420
  %v463 = vpack.c.b16 %v423, %v421
  %v464 = vpack.c.b16 %v426, %v424
  %v465 = vpack.c.b16 %v427, %v425
  %v466 = vpack.c.b16 %v430, %v428
  %v467 = vpack.c.b16 %v431, %v429
  %v468 = vpack.c.b16 %v434, %v432
  %v469 = vpack.c.b16 %v435, %v433
  %v470 = vpack.c.b16 %v438, %v436
  %v471 = vpack.c.b16 %v439, %v437
  %504 = vmatprep.subr.bf16.mxu0 %v455
  %505 = vmatpush1.bf16.msra.mxu0 %v454
  %506 = vmatprep.subr.bf16.mxu0 %v453
  %507 = vmatpush1.bf16.msra.mxu0 %v452
  %508 = vmatprep.subr.bf16.mxu0 %v451
  %509 = vmatpush1.bf16.msra.mxu0 %v450
  %510 = vmatprep.subr.bf16.mxu0 %v449
  %511 = vmatpush1.bf16.msra.mxu0 %v448
  %512 = vmatprep.subr.bf16.mxu0 %v447
  %513 = vmatpush1.bf16.msra.mxu0 %v446
  %514 = vmatprep.subr.bf16.mxu0 %v445
  %515 = vmatpush1.bf16.msra.mxu0 %v444
  %516 = vmatprep.subr.bf16.mxu0 %v443
  %517 = vmatpush1.bf16.msra.mxu0 %v442
  %518 = vmatprep.subr.bf16.mxu0 %v441
  %519 = vmatpush1.bf16.msra.mxu0 %v440
  %520 = vmatprep.subr.bf16.mxu0 %v471
  %521 = vmatpush2.bf16.msra.mxu0 %v470
  %522 = vmatprep.subr.bf16.mxu0 %v469
  %523 = vmatpush2.bf16.msra.mxu0 %v468
  %524 = vmatprep.subr.bf16.mxu0 %v467
  %525 = vmatpush2.bf16.msra.mxu0 %v466
  %526 = vmatprep.subr.bf16.mxu0 %v465
  %527 = vmatpush2.bf16.msra.mxu0 %v464
  %528 = vmatprep.subr.bf16.mxu0 %v463
  %529 = vmatpush2.bf16.msra.mxu0 %v462
  %530 = vmatprep.subr.bf16.mxu0 %v461
  %531 = vmatpush2.bf16.msra.mxu0 %v460
  %532 = vmatprep.subr.bf16.mxu0 %v459
  %533 = vmatpush2.bf16.msra.mxu0 %v458
  %534 = vmatprep.subr.bf16.mxu0 %v457
  %535 = vmatpush2.bf16.msra.mxu0 %v456
  %536 = vmatprep.mubr.bf16.mxu0 %v299
  %537 = vmatmul.mubr.bf16.gmra.mxu0 %v298
  %v538 = vpop.f32.mrf.mxu0
  %v539 = vadd.f32 %v337, %v538
  %v540 = vpop.f32.mrf.mxu0
  %v541 = vadd.f32 %v341, %v540
  %v542 = vpop.f32.mrf.mxu0
  %v543 = vpop.f32.mrf.mxu0
  %544 = vdwg.mxu0
  %v545 = vmul.f32 %v541, 1.442695
  %v546 = vpow.pop %v545
  %v547 = vadd.f32 %v546, 0.0001
  %v548 = vld [vmem:[%s8] sm:$0xff]
  %v549 = vrsqrt.pop %v547
  %v550 = vmul.f32 %v547, %v549
  %vm551 = vcmp.eq.f32.partialorder %v547, inf
  %v552 = vsel %vm551, %v547, %v550
  %vm553 = vcmp.eq.f32.partialorder %v547, 0.0
  %v554 = vand.u32 %v547, 2147483648
  %v555 = vsel %vm553, %v554, %v552
  %v556 = vmul.f32 %v555, %v548
  %v557 = vadd.f32 %v539, %v556
  %v558 = vld [vmem:[%s7] sm:$0x1]
  %v560 = vlaneseq
  %v561 = vshrl.u32 %v560, 7
  %v562 = vsub.s32 0, %v561
  %v563 = vrot.slane %v558, %v562
  %v565 = vadd.f32 %v557, %v563
  %566 = vmax.xlane.f32.xlu0 %v565
  %v567 = vpop.xlane.xlu0 %566
  %v568 = vsub.f32 %v565, %v567
  %v569 = vmul.f32 %v568, 1.442695
  %v570 = vpow.pop %v569
  %571 = vadd.xlane.f32.xlu0 %v570
  %v572 = vpop.xlane.xlu0 %571
  %v573 = vrcp.pop %v572
  %v574 = vmul.f32 %v570, %v573
  %576 = vrot.lane.b32.xlu0 %v548, 1
  %v577 = vpop.permute.xlu0 %576
  %v579 = vmul.f32 %v555, %v577
  %581 = vrot.lane.b32.xlu0 %v579, 127
  %v582 = vpop.permute.xlu0 %581
  %v584 = vadd.f32 %v541, %v582
  %v585 = vmin.f32 %v584, 15.0
  %v586 = vmul.f32 %v585, 1.442695
  %v587 = vpow.pop %v586
  %v588 = vlaneseq
  %v589 = vand.u32 %v588, 127
  %vm590 = vcmp.ge.s32.totalorder %v589, 0
  %vm591 = vcmp.lt.s32.totalorder %v589, 16
  %vm592 = vmand %vm590, %vm591
  %v593 = vsel %vm592, %v539, 0.0
  %594 = vrot.lane.b32.xlu0 %v547, 16
  %v595 = vpop.permute.xlu0 %594
  %vm596 = vcmp.ge.s32.totalorder %v589, 16
  %vm597 = vcmp.lt.s32.totalorder %v589, 32
  %vm598 = vmand %vm596, %vm597
  %v599 = vsel %vm598, %v595, 0.0
  %v600 = vadd.f32 %v593, %v599
  %601 = vrot.lane.b32.xlu0 %v557, 32
  %v602 = vpop.permute.xlu0 %601
  %vm603 = vcmp.ge.s32.totalorder %v589, 32
  %vm604 = vcmp.lt.s32.totalorder %v589, 48
  %vm605 = vmand %vm603, %vm604
  %v606 = vsel %vm605, %v602, 0.0
  %v607 = vadd.f32 %v600, %v606
  %608 = vrot.lane.b32.xlu0 %v574, 48
  %v609 = vpop.permute.xlu0 %608
  %vm610 = vcmp.ge.s32.totalorder %v589, 48
  %vm611 = vcmp.lt.s32.totalorder %v589, 64
  %vm612 = vmand %vm610, %vm611
  %v613 = vsel %vm612, %v609, 0.0
  %v614 = vadd.f32 %v607, %v613
  %vm615 = vcmp.eq.s32.totalorder %v589, 64
  %617 = vset.pattern.permute.xlu0 16
  %618 = vperm.xlu0 %617, %v541
  %v619 = vpop.permute.xlu0 %618
  %v621 = vsel %vm615, %v619, 0.0
  %v622 = vadd.f32 %v614, %v621
  %vm623 = vcmp.eq.s32.totalorder %v589, 65
  %625 = vset.pattern.permute.xlu0 17
  %626 = vperm.xlu0 %625, %v547
  %v627 = vpop.permute.xlu0 %626
  %v629 = vsel %vm623, %v627, 0.0
  %v630 = vadd.f32 %v622, %v629
  %vm631 = vcmp.eq.s32.totalorder %v589, 66
  %633 = vset.pattern.permute.xlu0 16
  %634 = vperm.xlu0 %633, %v585
  %v635 = vpop.permute.xlu0 %634
  %v637 = vsel %vm631, %v635, 0.0
  %v638 = vadd.f32 %v630, %v637
  %vm639 = vcmp.eq.s32.totalorder %v589, 67
  %641 = vset.pattern.permute.xlu0 16
  %642 = vperm.xlu0 %641, %v587
  %v643 = vpop.permute.xlu0 %642
  %v645 = vsel %vm639, %v643, 0.0
  %v646 = vadd.f32 %v638, %v645
  %647 = vst [vmem:[%s9] sm:$0xff] %v646
  // Predicated region
  $region38: #{encoder_totalvi_forward.1} parent=0 // pred_check
    _
  $region39: #{encoder_totalvi_forward.1} parent=0 // pred_check_branch
    %649 = sbr.rel (0) target = $region41
  $region40: #{encoder_totalvi_forward.1} parent=0 // pred_region
    _
  $region41: #{encoder_totalvi_forward.1} parent=0 // pred_fallthru
    _
  // Predicated region
  $region42: #{encoder_totalvi_forward.1} parent=0 // pred_check
    _
  $region43: #{encoder_totalvi_forward.1} parent=0 // pred_check_branch
    %651 = sbr.rel (0) target = $region45
  $region44: #{encoder_totalvi_forward.1} parent=0 // pred_region
    _
  $region45: #{encoder_totalvi_forward.1} parent=0 // pred_fallthru
    _

</llo_original>
